<compile_context>
chip_gen: v6e
topology: v6e:2x2x1
jax: 0.10.0
libtpu: 0.0.40
codegen_flags: <defaults>
</compile_context>

<pallas_src>
import math

import jax
import jax.numpy as jnp
from jax.experimental import pallas as pl
from jax.experimental.pallas import tpu as pltpu

BN_EPS = 1e-5


def _round_up(v: int, m: int) -> int:
    return ((v + m - 1) // m) * m


def _row_block(total: int, cap: int) -> int:
    """Largest multiple of 128 <= cap that divides `total` (total % 128 == 0)."""
    best = 128
    d = 128
    limit = min(total, cap)
    while d <= limit:
        if total % d == 0:
            best = d
        d += 128
    return best


def _adj_support_kernel(adj_ref, sup_ref, y_ref, s_ref, ss_ref, acc_ref):
    """acc += adj_tile(bf16) @ support_tile(bf16); finalize: bf16 y + f32 BN sums."""
    k = pl.program_id(1)

    @pl.when(k == 0)
    def _init():
        acc_ref[...] = jnp.zeros_like(acc_ref)

    acc_ref[...] += jnp.dot(adj_ref[...].astype(jnp.bfloat16), sup_ref[...],
                            preferred_element_type=jnp.float32)

    @pl.when(k == pl.num_programs(1) - 1)
    def _finalize():
        y = acc_ref[...]
        y_ref[...] = y.astype(y_ref.dtype)
        s_ref[...] = jnp.sum(y, axis=0, keepdims=True)
        ss_ref[...] = jnp.sum(y * y, axis=0, keepdims=True)


def _adj_x_project_kernel(adj_ref, x_ref, w_ref, y_ref, s_ref, ss_ref, acc_ref):
    """acc += adj_tile @ x_tile; finalize: y = acc @ W (bf16 MXU), bf16 y + stats."""
    k = pl.program_id(1)

    @pl.when(k == 0)
    def _init():
        acc_ref[...] = jnp.zeros_like(acc_ref)

    acc_ref[...] += jnp.dot(adj_ref[...].astype(jnp.bfloat16), x_ref[...],
                            preferred_element_type=jnp.float32)

    @pl.when(k == pl.num_programs(1) - 1)
    def _finalize():
        y = jnp.dot(acc_ref[...].astype(jnp.bfloat16), w_ref[...],
                    preferred_element_type=jnp.float32)
        y_ref[...] = y.astype(y_ref.dtype)
        s_ref[...] = jnp.sum(y, axis=0, keepdims=True)
        ss_ref[...] = jnp.sum(y * y, axis=0, keepdims=True)


def _bn_relu_kernel(y_ref, mean_ref, istd_ref, o_ref):
    y = y_ref[...].astype(jnp.float32)
    o_ref[...] = jnp.maximum((y - mean_ref[...]) * istd_ref[...], 0.0).astype(o_ref.dtype)


def gcn_layer(x, adj, weights, *, tm=512, tk=2048, bn_rows=2048):
    """relu(BatchNorm1d(adj @ (x @ weights))) — GCNLayer.forward with default config."""
    n, f_in = x.shape
    f_out = weights.shape[1]
    assert adj.shape == (n, n)
    assert weights.shape[0] == f_in

    f_in_pad = _round_up(f_in, 128)
    f_out_pad = _round_up(f_out, 128)
    # MXU passes come in 128-lane units: compare padded widths, prefer the
    # projection-free lane-dense path on ties.
    project_first = f_out_pad <= f_in_pad

    # Row tiles: multiple of 128; keep >= 2 row tiles so the "parallel" axis can be
    # split across v7x's two TensorCores.  K tile clamped to the (padded) N.
    tm = max(128, min(_round_up(tm, 128), _round_up(pl.cdiv(n, 2), 128)))
    tk = max(128, min(_round_up(tk, 128), _round_up(n, 128)))
    n_rows = _round_up(n, tm)
    n_cols = _round_up(n, tk)
    gi, gk = n_rows // tm, n_cols // tk

    # adj: no wrapper-side dtype cast (cast to bf16 happens in-kernel); pad with
    # zeros only when N is not tile aligned, so single-use adjacency is read once.
    if adj.shape == (n_rows, n_cols):
        adj_p = adj
    else:
        adj_p = jnp.zeros((n_rows, n_cols), adj.dtype).at[:n, :n].set(adj)

    if project_first:
        # Hoist x @ W out of the k loop: tiny (N, F_in, F_out) matmul in plain XLA.
        support = jnp.dot(x, weights, preferred_element_type=jnp.float32)
        rhs = jnp.zeros((n_cols, f_out_pad), jnp.bfloat16)
        rhs = rhs.at[:n, :f_out].set(support.astype(jnp.bfloat16))
        kernel = _adj_support_kernel
        operands = (adj_p, rhs)
        in_specs = [
            pl.BlockSpec((tm, tk), lambda i, k: (i, k)),               # adj tile
            pl.BlockSpec((tk, f_out_pad), lambda i, k: (k, 0)),        # support tile
        ]
        acc_width = f_out_pad
    else:
        # F_in (padded) is narrower: contract adj against x, project in finalize.
        x_p = jnp.zeros((n_cols, f_in_pad), jnp.bfloat16).at[:n, :f_in].set(
            x.astype(jnp.bfloat16))
        w_p = jnp.zeros((f_in_pad, f_out_pad), jnp.bfloat16).at[:f_in, :f_out].set(
            weights.astype(jnp.bfloat16))
        kernel = _adj_x_project_kernel
        operands = (adj_p, x_p, w_p)
        in_specs = [
            pl.BlockSpec((tm, tk), lambda i, k: (i, k)),               # adj tile
            pl.BlockSpec((tk, f_in_pad), lambda i, k: (k, 0)),         # x tile
            pl.BlockSpec((f_in_pad, f_out_pad), lambda i, k: (0, 0)),  # W (resident)
        ]
        acc_width = f_in_pad

    y, psum, psumsq = pl.pallas_call(
        kernel,
        out_shape=(
            jax.ShapeDtypeStruct((n_rows, f_out_pad), jnp.bfloat16),   # bf16 y
            jax.ShapeDtypeStruct((gi, 1, f_out_pad), jnp.float32),     # per-tile sum
            jax.ShapeDtypeStruct((gi, 1, f_out_pad), jnp.float32),     # per-tile sumsq
        ),
        grid=(gi, gk),
        in_specs=in_specs,
        out_specs=(
            pl.BlockSpec((tm, f_out_pad), lambda i, k: (i, 0)),
            pl.BlockSpec((None, 1, f_out_pad), lambda i, k: (i, 0, 0)),
            pl.BlockSpec((None, 1, f_out_pad), lambda i, k: (i, 0, 0)),
        ),
        scratch_shapes=[pltpu.VMEM((tm, acc_width), jnp.float32)],
        compiler_params=pltpu.CompilerParams(
            dimension_semantics=("parallel", "arbitrary"),
            # ~10 MiB footprint at default tiles; explicit limit clears v5e's 16 MiB
            # scoped default and stays well inside v7x's 64 MiB physical VMEM.
            vmem_limit_bytes=32 * 1024 * 1024,
        ),
    )(*operands)

    # Tiny cross-row-tile combine of BN statistics (O(gi * F_out), plain XLA).
    mean = jnp.sum(psum[:, 0, :], axis=0) / n
    ex2 = jnp.sum(psumsq[:, 0, :], axis=0) / n
    var = ex2 - mean * mean                       # biased variance (BatchNorm1d)
    inv_std = jax.lax.rsqrt(var + BN_EPS)

    # Normalize + ReLU in place on the bf16 y: fat row blocks, aliased output.
    bn_tm = _row_block(n_rows, bn_rows)
    out_pad = pl.pallas_call(
        _bn_relu_kernel,
        out_shape=jax.ShapeDtypeStruct((n_rows, f_out_pad), jnp.bfloat16),
        grid=(n_rows // bn_tm,),
        in_specs=[
            pl.BlockSpec((bn_tm, f_out_pad), lambda i: (i, 0)),
            pl.BlockSpec((1, f_out_pad), lambda i: (0, 0)),
            pl.BlockSpec((1, f_out_pad), lambda i: (0, 0)),
        ],
        out_specs=pl.BlockSpec((bn_tm, f_out_pad), lambda i: (i, 0)),
        input_output_aliases={0: 0},
        compiler_params=pltpu.CompilerParams(
            dimension_semantics=("parallel",)),
    )(y, mean[None, :], inv_std[None, :])

    # TODO(synk): bias=True / 'LN' / identity norm-or-activation variants of the
    # module are not wired up; only the defaults (bias=False, 'BN', 'relu').
    return out_pad[:n, :f_out].astype(jnp.float32)


if __name__ == "__main__":
    N = 256
    F_IN = 16

    key = jax.random.PRNGKey(0)
    kx, kadj, kw1, kw2 = jax.random.split(key, 4)

    x = jax.random.normal(kx, (N, F_IN), dtype=jnp.float32)
    # Sparse-ish symmetric adjacency with self loops, row-normalized (typical GCN).
    mask = jax.random.uniform(kadj, (N, N)) < 0.03
    a = jnp.where(mask | mask.T, 1.0, 0.0) + jnp.eye(N, dtype=jnp.float32)
    adj = a / jnp.sum(a, axis=1, keepdims=True)

    def reference(x_, adj_, w_):
        y = adj_ @ (x_ @ w_)
        mu = y.mean(axis=0, keepdims=True)
        var = ((y - mu) ** 2).mean(axis=0, keepdims=True)
        return jnp.maximum((y - mu) / jnp.sqrt(var + BN_EPS), 0.0)

    def check(out, ref):
        assert out.shape == ref.shape
        assert bool(jnp.all(jnp.isfinite(out)))
        err = jnp.abs(out - ref)
        # bf16 MXU operands + bf16 y/out storage vs a pure-f32 reference; BN's
        # divide-by-batch-std amplifies quantization, so tolerances are loose but
        # still far below the O(1) scale of normalized activations.
        assert float(jnp.max(err)) < 1e-1, f"max abs err {float(jnp.max(err))}"
        assert float(jnp.mean(err)) < 2e-2, f"mean abs err {float(jnp.mean(err))}"

    # Case 1: F_out_pad <= F_in_pad -> hoisted support, adj @ support path.
    # tm=tk=128 so the demo exercises a 2x2 grid (row tiles + K accumulation).
    F_OUT1 = 32
    std1 = 1.0 / math.sqrt(F_OUT1)
    w1 = jax.random.uniform(kw1, (F_IN, F_OUT1), dtype=jnp.float32,
                            minval=-std1, maxval=std1)
    out1 = gcn_layer(x, adj, w1, tm=128, tk=128)
    jax.block_until_ready(out1)
    check(out1, reference(x, adj, w1))

    # Case 2: F_out_pad > F_in_pad -> adj @ x accumulate + projection in finalize.
    # Default tile sizes (clamped to N, >= 2 row tiles for the parallel axis).
    F_OUT2 = 256
    std2 = 1.0 / math.sqrt(F_OUT2)
    w2 = jax.random.uniform(kw2, (F_IN, F_OUT2), dtype=jnp.float32,
                            minval=-std2, maxval=std2)
    out2 = gcn_layer(x, adj, w2)
    jax.block_until_ready(out2)
    check(out2, reference(x, adj, w2))

    print("KERNEL_OK")
</pallas_src>

<mosaic_0001>
module attributes {stable_mosaic.version = 11 : i64} {
  func.func @_adj_support_kernel(%arg0: i32, %arg1: i32, %arg2: memref<128x128xf32, #tpu.memory_space<vmem>>, %arg3: memref<128x128xbf16, #tpu.memory_space<vmem>>, %arg4: memref<128x128xbf16, #tpu.memory_space<vmem>>, %arg5: memref<1x1x128xf32, #tpu.memory_space<vmem>>, %arg6: memref<1x1x128xf32, #tpu.memory_space<vmem>>, %arg7: memref<128x128xf32, #tpu.memory_space<vmem>>) attributes {dimension_semantics = [#tpu.dimension_semantics<parallel>, #tpu.dimension_semantics<arbitrary>], iteration_bounds = array<i64: 2, 2>, scalar_prefetch = 0 : i64, scratch_operands = 1 : i64, tpu.core_type = #tpu.core_type<tc>, window_params = [{transform_indices = @transform_0, window_bounds = array<i64: 128, 128>}, {transform_indices = @transform_1, window_bounds = array<i64: 128, 128>}, {transform_indices = @transform_2, window_bounds = array<i64: 128, 128>}, {transform_indices = @transform_3, window_bounds = array<i64: 1, 1, 128>}, {transform_indices = @transform_4, window_bounds = array<i64: 1, 1, 128>}]} {
    %c0_i32 = arith.constant 0 : i32
    %0 = arith.cmpi eq, %arg1, %c0_i32 : i32
    %1 = arith.extui %0 : i1 to i32
    %c0_i32_0 = arith.constant 0 : i32
    %2 = arith.cmpi ne, %1, %c0_i32_0 : i32
    scf.if %2 {
      %cst_9 = arith.constant 0.000000e+00 : f32
      %13 = vector.broadcast %cst_9 : f32 to vector<128x128xf32>
      %c0_10 = arith.constant 0 : index
      %c0_11 = arith.constant 0 : index
      %14 = vector.load %arg7[%c0_10, %c0_11] : memref<128x128xf32, #tpu.memory_space<vmem>>, vector<128x128xf32>
      tpu.vector_store %arg7[%c0_10, %c0_11], %13 {strides = array<i32>} : memref<128x128xf32, #tpu.memory_space<vmem>>, vector<128x128xf32>,
    } else {
    }
    %c0 = arith.constant 0 : index
    %c0_1 = arith.constant 0 : index
    %3 = vector.load %arg7[%c0, %c0_1] : memref<128x128xf32, #tpu.memory_space<vmem>>, vector<128x128xf32>
    %c0_2 = arith.constant 0 : index
    %c0_3 = arith.constant 0 : index
    %4 = vector.load %arg2[%c0_2, %c0_3] : memref<128x128xf32, #tpu.memory_space<vmem>>, vector<128x128xf32>
    %5 = arith.truncf %4 : vector<128x128xf32> to vector<128x128xbf16>
    %c0_4 = arith.constant 0 : index
    %c0_5 = arith.constant 0 : index
    %6 = vector.load %arg3[%c0_4, %c0_5] : memref<128x128xbf16, #tpu.memory_space<vmem>>, vector<128x128xbf16>
    %cst = arith.constant dense<0.000000e+00> : vector<128x128xf32>
    %7 = tpu.matmul %5, %6, %cst {dimension_numbers = #tpu.dot_dimension_numbers<[1], [0], [0], [1], [0, 0, 1, 1], [], []>} : vector<128x128xbf16>, vector<128x128xbf16>, vector<128x128xf32> -> vector<128x128xf32>
    %8 = arith.addf %3, %7 : vector<128x128xf32>
    %c0_6 = arith.constant 0 : index
    %c0_7 = arith.constant 0 : index
    %9 = vector.load %arg7[%c0_6, %c0_7] : memref<128x128xf32, #tpu.memory_space<vmem>>, vector<128x128xf32>
    tpu.vector_store %arg7[%c0_6, %c0_7], %8 {strides = array<i32>} : memref<128x128xf32, #tpu.memory_space<vmem>>, vector<128x128xf32>,
    %c1_i32 = arith.constant 1 : i32
    %10 = arith.cmpi eq, %arg1, %c1_i32 : i32
    %11 = arith.extui %10 : i1 to i32
    %c0_i32_8 = arith.constant 0 : i32
    %12 = arith.cmpi ne, %11, %c0_i32_8 : i32
    scf.if %12 {
      %c0_9 = arith.constant 0 : index
      %c0_10 = arith.constant 0 : index
      %13 = vector.load %arg7[%c0_9, %c0_10] : memref<128x128xf32, #tpu.memory_space<vmem>>, vector<128x128xf32>
      %14 = arith.truncf %13 : vector<128x128xf32> to vector<128x128xbf16>
      %c0_11 = arith.constant 0 : index
      %c0_12 = arith.constant 0 : index
      %15 = vector.load %arg4[%c0_11, %c0_12] : memref<128x128xbf16, #tpu.memory_space<vmem>>, vector<128x128xbf16>
      tpu.vector_store %arg4[%c0_11, %c0_12], %14 {strides = array<i32>} : memref<128x128xbf16, #tpu.memory_space<vmem>>, vector<128x128xbf16>,
      %cst_13 = arith.constant dense<0.000000e+00> : vector<128xf32>
      %16 = vector.multi_reduction <add>, %13, %cst_13 [0] : vector<128x128xf32> to vector<128xf32>
      %17 = vector.shape_cast %16 : vector<128xf32> to vector<1x128xf32>
      %c0_14 = arith.constant 0 : index
      %c0_15 = arith.constant 0 : index
      %c0_16 = arith.constant 0 : index
      %18 = vector.load %arg5[%c0_14, %c0_15, %c0_16] : memref<1x1x128xf32, #tpu.memory_space<vmem>>, vector<1x1x128xf32>
      %19 = vector.shape_cast %18 : vector<1x1x128xf32> to vector<1x128xf32>
      %20 = vector.shape_cast %17 : vector<1x128xf32> to vector<1x1x128xf32>
      tpu.vector_store %arg5[%c0_14, %c0_15, %c0_16], %20 {strides = array<i32>} : memref<1x1x128xf32, #tpu.memory_space<vmem>>, vector<1x1x128xf32>,
      %21 = arith.mulf %13, %13 : vector<128x128xf32>
      %cst_17 = arith.constant dense<0.000000e+00> : vector<128xf32>
      %22 = vector.multi_reduction <add>, %21, %cst_17 [0] : vector<128x128xf32> to vector<128xf32>
      %23 = vector.shape_cast %22 : vector<128xf32> to vector<1x128xf32>
      %c0_18 = arith.constant 0 : index
      %c0_19 = arith.constant 0 : index
      %c0_20 = arith.constant 0 : index
      %24 = vector.load %arg6[%c0_18, %c0_19, %c0_20] : memref<1x1x128xf32, #tpu.memory_space<vmem>>, vector<1x1x128xf32>
      %25 = vector.shape_cast %24 : vector<1x1x128xf32> to vector<1x128xf32>
      %26 = vector.shape_cast %23 : vector<1x128xf32> to vector<1x1x128xf32>
      tpu.vector_store %arg6[%c0_18, %c0_19, %c0_20], %26 {strides = array<i32>} : memref<1x1x128xf32, #tpu.memory_space<vmem>>, vector<1x1x128xf32>,
    } else {
    }
    return
  }
  func.func @transform_0(%arg0: i32, %arg1: i32) -> (i32, i32) {
    %c0_i32 = arith.constant 0 : i32
    return %arg0, %arg1 : i32, i32
  }
  func.func @transform_1(%arg0: i32, %arg1: i32) -> (i32, i32) {
    %c0_i32 = arith.constant 0 : i32
    %c0_i32_0 = arith.constant 0 : i32
    return %arg1, %c0_i32 : i32, i32
  }
  func.func @transform_2(%arg0: i32, %arg1: i32) -> (i32, i32) {
    %c0_i32 = arith.constant 0 : i32
    %c0_i32_0 = arith.constant 0 : i32
    return %arg0, %c0_i32 : i32, i32
  }
  func.func @transform_3(%arg0: i32, %arg1: i32) -> (i32, i32, i32) {
    %c0_i32 = arith.constant 0 : i32
    %c0_i32_0 = arith.constant 0 : i32
    %c0_i32_1 = arith.constant 0 : i32
    return %arg0, %c0_i32, %c0_i32_0 : i32, i32, i32
  }
  func.func @transform_4(%arg0: i32, %arg1: i32) -> (i32, i32, i32) {
    %c0_i32 = arith.constant 0 : i32
    %c0_i32_0 = arith.constant 0 : i32
    %c0_i32_1 = arith.constant 0 : i32
    return %arg0, %c0_i32, %c0_i32_0 : i32, i32, i32
  }
}

</mosaic_0001>

<llo_original>
// kernel: tpu_custom_call.1
$region0: #{tpu_custom_call.1}
  #allocation0 [shape = 'u32[]', space=smem, size = 0x4, offset = 0x4, fixed_abs, tag = 'smem constant byte address 0x4 - core index']
  #allocation1 [shape = 'u32[144,128]{1,0:T(1,128)}', space=vmem, size = 0x12000, scoped, tag = 'internal scratch']
  #allocation2 [shape = 'f32[128,128]{1,0:T(8,128)}', space=vmem, size = 0x10000, scoped, tag = 'scratch operand']
  %s0 = inlined_call_operand.hbm [shape: f32[256,256], index: 0, kind: input, shape index: {}]
  %s1 = inlined_call_operand.hbm [shape: bf16[256,128], index: 1, kind: input, shape index: {}]
  %s2 = inlined_call_operand.hbm [shape: bf16[256,128], index: 2, kind: output, shape index: {0}]
  %s3 = inlined_call_operand.hbm [shape: f32[2,1,128], index: 3, kind: output, shape index: {1}]
  %s4 = inlined_call_operand.hbm [shape: f32[2,1,128], index: 4, kind: output, shape index: {2}]
  %5 = xla_tuple %s2, %s3, %s4
  %s6 = sld [smem:[#allocation0]]
  $region73: #{tpu_custom_call.1} parent=0
    _
  %s8 = ssub.s32 1, %s6
  %s9 = scalar_select 0, %s8, %s6
  $region1: #{tpu_custom_call.1} parent=0
    #allocation3 [shape = 'u8[131072]{0}', space=vmem, size = 0x20000, scoped, tag = 'input window, operand 0']
    #allocation4 [shape = 's32[2]{0}', space=sflag, size = 0x8, scoped, tag = 'scoped memory for tpu_custom_call.1']
    #allocation5 [shape = 's32[2]{0}', space=sflag, size = 0x8, scoped, tag = 'scoped memory for tpu_custom_call.1']
    #allocation6 [shape = 'u8[65536]{0}', space=vmem, size = 0x10000, scoped, tag = 'input window, operand 1']
    #allocation7 [shape = 's32[2]{0}', space=sflag, size = 0x8, scoped, tag = 'scoped memory for tpu_custom_call.1']
    #allocation8 [shape = 'u8[65536]{0}', space=vmem, size = 0x10000, scoped, tag = 'output window, operand 0']
    #allocation9 [shape = 'u8[1024]{0}', space=vmem, size = 0x400, scoped, tag = 'output window, operand 1']
    #allocation10 [shape = 's32[2]{0}', space=sflag, size = 0x8, scoped, tag = 'scoped memory for tpu_custom_call.1']
    #allocation11 [shape = 'u8[1024]{0}', space=vmem, size = 0x400, scoped, tag = 'output window, operand 2']
    %10 = vsyncpa [#allocation4], 0
    %s11 = scalar_lea.sflag [#allocation4], 1
    %12 = vsyncpa %s11, 0
    %13 = vsyncpa [#allocation7], 0
    %s14 = scalar_lea.sflag [#allocation7], 1
    %15 = vsyncpa %s14, 0
    %16 = vsyncpa [#allocation5], 0
    %s17 = scalar_lea.sflag [#allocation5], 1
    %18 = vsyncpa %s17, 0
    %19 = vsyncpa [#allocation10], 0
    %s20 = scalar_lea.sflag [#allocation10], 1
    %21 = vsyncpa %s20, 0
    loop: start=0, step=1, limit=6
    $region2: #{tpu_custom_call.1} parent=1 // loop_pre_header
      _
    $region3: #{tpu_custom_call.1} parent=1 // loop_header
      %s23 = sphi 0, %s27
      %p24 = scmp.ge.s32.totalorder %s23, 6
      %s30 = sphi 0, %s42
      %s31 = sphi 0, %s38
      %s32 = sphi 0, %s30
      %s33 = sphi 0, %s31
      %s34 = sphi 0, %s32
      %s35 = sphi 0, %s33
      %s47 = sphi 0, %s49
      %s50 = sphi 0, %s47
      %s51 = sphi 0, %s50
      %s67 = sphi 0, %s51
      %s73 = sphi 0, %s75
      %s76 = sphi 0, %s73
      %s77 = sphi 0, %s76
      %s93 = sphi 0, %s77
      %s99 = sphi 0, %s101
      %s102 = sphi 0, %s99
      %s103 = sphi 0, %s102
      %s119 = sphi 0, %s103
      %s125 = sphi 0, %s127
      %s128 = sphi 0, %s125
      %s129 = sphi 0, %s128
      %s145 = sphi 0, %s129
      %s151 = sphi 0, %s153
      %s154 = sphi 0, %s151
      %s155 = sphi 0, %s154
      %s171 = sphi 0, %s155
    $region4: #{tpu_custom_call.1} parent=1 // loop_header_branch
      %26 = sbr.rel (%p24) target = $region8
    $region5: #{tpu_custom_call.1} parent=1 // loop_body
      %s28 = ssub.s32 %s23, 1
      %s29 = ssub.s32 %s23, 2
      %s36 = sadd.s32 1, %s31
      %p37 = scmp.ge.s32.totalorder %s36, 2
      %s38 = scalar_select %p37, 0, %s36
      %s39 = sadd.s32 1, %s30
      %s40 = scalar_select %p37, %s39, %s30
      %p41 = scmp.ge.s32.totalorder %s40, 2
      %s42 = scalar_select %p41, 0, %s40
      %s43 = ssub.s32 %s30, %s42
      %s44 = ssub.s32 %s31, %s38
      %s45 = sor.u32 %s43, %s44
      %p46 = scmp.eq.s32.totalorder %s45, 0
      %s48 = sadd.s32 %s47, 1
      %s49 = scalar_select %p46, %s47, %s48
      %p52 = pneg %p46
      %p53 = scmp.eq.s32.totalorder %s23, 3
      %p54 = por %p52, %p53
      %p55 = scmp.ne.s32.totalorder %s47, %s50
      %p56 = scmp.eq.s32.totalorder %s23, 0
      %p57 = por %p55, %p56
      %p58 = scmp.ne.s32.totalorder %s47, %s50
      %p59 = scmp.eq.s32.totalorder %s28, 3
      %p60 = por %p58, %p59
      %p61 = scmp.ne.s32.totalorder %s50, %s51
      %p62 = scmp.eq.s32.totalorder %s28, 0
      %p63 = por %p61, %p62
      %p64 = scmp.ne.s32.totalorder %s50, %s51
      %p65 = scmp.eq.s32.totalorder %s29, 3
      %p66 = por %p64, %p65
      %p68 = scmp.ne.s32.totalorder %s51, %s67
      %p69 = scmp.eq.s32.totalorder %s29, 0
      %p70 = por %p68, %p69
      %s71 = ssub.s32 %s31, %s38
      %p72 = scmp.eq.s32.totalorder %s71, 0
      %s74 = sadd.s32 %s73, 1
      %s75 = scalar_select %p72, %s73, %s74
      %p78 = pneg %p72
      %p79 = scmp.eq.s32.totalorder %s23, 3
      %p80 = por %p78, %p79
      %p81 = scmp.ne.s32.totalorder %s73, %s76
      %p82 = scmp.eq.s32.totalorder %s23, 0
      %p83 = por %p81, %p82
      %p84 = scmp.ne.s32.totalorder %s73, %s76
      %p85 = scmp.eq.s32.totalorder %s28, 3
      %p86 = por %p84, %p85
      %p87 = scmp.ne.s32.totalorder %s76, %s77
      %p88 = scmp.eq.s32.totalorder %s28, 0
      %p89 = por %p87, %p88
      %p90 = scmp.ne.s32.totalorder %s76, %s77
      %p91 = scmp.eq.s32.totalorder %s29, 3
      %p92 = por %p90, %p91
      %p94 = scmp.ne.s32.totalorder %s77, %s93
      %p95 = scmp.eq.s32.totalorder %s29, 0
      %p96 = por %p94, %p95
      %s97 = ssub.s32 %s30, %s42
      %p98 = scmp.eq.s32.totalorder %s97, 0
      %s100 = sadd.s32 %s99, 1
      %s101 = scalar_select %p98, %s99, %s100
      %p104 = pneg %p98
      %p105 = scmp.eq.s32.totalorder %s23, 3
      %p106 = por %p104, %p105
      %p107 = scmp.ne.s32.totalorder %s99, %s102
      %p108 = scmp.eq.s32.totalorder %s23, 0
      %p109 = por %p107, %p108
      %p110 = scmp.ne.s32.totalorder %s99, %s102
      %p111 = scmp.eq.s32.totalorder %s28, 3
      %p112 = por %p110, %p111
      %p113 = scmp.ne.s32.totalorder %s102, %s103
      %p114 = scmp.eq.s32.totalorder %s28, 0
      %p115 = por %p113, %p114
      %p116 = scmp.ne.s32.totalorder %s102, %s103
      %p117 = scmp.eq.s32.totalorder %s29, 3
      %p118 = por %p116, %p117
      %p120 = scmp.ne.s32.totalorder %s103, %s119
      %p121 = scmp.eq.s32.totalorder %s29, 0
      %p122 = por %p120, %p121
      %s123 = ssub.s32 %s30, %s42
      %p124 = scmp.eq.s32.totalorder %s123, 0
      %s126 = sadd.s32 %s125, 1
      %s127 = scalar_select %p124, %s125, %s126
      %p130 = pneg %p124
      %p131 = scmp.eq.s32.totalorder %s23, 3
      %p132 = por %p130, %p131
      %p133 = scmp.ne.s32.totalorder %s125, %s128
      %p134 = scmp.eq.s32.totalorder %s23, 0
      %p135 = por %p133, %p134
      %p136 = scmp.ne.s32.totalorder %s125, %s128
      %p137 = scmp.eq.s32.totalorder %s28, 3
      %p138 = por %p136, %p137
      %p139 = scmp.ne.s32.totalorder %s128, %s129
      %p140 = scmp.eq.s32.totalorder %s28, 0
      %p141 = por %p139, %p140
      %p142 = scmp.ne.s32.totalorder %s128, %s129
      %p143 = scmp.eq.s32.totalorder %s29, 3
      %p144 = por %p142, %p143
      %p146 = scmp.ne.s32.totalorder %s129, %s145
      %p147 = scmp.eq.s32.totalorder %s29, 0
      %p148 = por %p146, %p147
      %s149 = ssub.s32 %s30, %s42
      %p150 = scmp.eq.s32.totalorder %s149, 0
      %s152 = sadd.s32 %s151, 1
      %s153 = scalar_select %p150, %s151, %s152
      %p156 = pneg %p150
      %p157 = scmp.eq.s32.totalorder %s23, 3
      %p158 = por %p156, %p157
      %p159 = scmp.ne.s32.totalorder %s151, %s154
      %p160 = scmp.eq.s32.totalorder %s23, 0
      %p161 = por %p159, %p160
      %p162 = scmp.ne.s32.totalorder %s151, %s154
      %p163 = scmp.eq.s32.totalorder %s28, 3
      %p164 = por %p162, %p163
      %p165 = scmp.ne.s32.totalorder %s154, %s155
      %p166 = scmp.eq.s32.totalorder %s28, 0
      %p167 = por %p165, %p166
      %p168 = scmp.ne.s32.totalorder %s154, %s155
      %p169 = scmp.eq.s32.totalorder %s29, 3
      %p170 = por %p168, %p169
      %p172 = scmp.ne.s32.totalorder %s155, %s171
      %p173 = scmp.eq.s32.totalorder %s29, 0
      %p174 = por %p172, %p173
      %p175 = scmp.le.s32.totalorder 1, %s23
      %p176 = scmp.lt.s32.totalorder %s23, 5
      %p177 = pnand %p175, %p176
      %p178 = pneg %p177
      // Predicated region
      $region9: #{tpu_custom_call.1} parent=5 // pred_check
        _
      $region10: #{tpu_custom_call.1} parent=5 // pred_check_branch
        %180 = sbr.rel (%p177) target = $region12
      $region11: #{tpu_custom_call.1} parent=5 // pred_region
        %s181 = ssub.s32 %s23, 1
      $region12: #{tpu_custom_call.1} parent=5 // pred_fallthru
        _
      %p182 = scmp.lt.s32.totalorder %s23, 4
      // Predicated region
      $region13: #{tpu_custom_call.1} parent=5 // pred_check
        %p183 = pneg %p182
      $region14: #{tpu_custom_call.1} parent=5 // pred_check_branch
        %185 = sbr.rel (%p183) target = $region16
      $region15: #{tpu_custom_call.1} parent=5 // pred_region
        // Predicated region
        $region17: #{tpu_custom_call.1} parent=15 // pred_check
          %p186 = pneg %p57
        $region18: #{tpu_custom_call.1} parent=15 // pred_check_branch
          %188 = sbr.rel (%p186) target = $region20
        $region19: #{tpu_custom_call.1} parent=15 // pred_region
          %s189 = sand.u32 %s47, 1
          %s190 = scalar_lea.sflag [#allocation4], %s189
          %s191 = sand.u32 %s47, 1
          %s192 = smul.addr %s191, 128
          %s193 = scalar_lea.vmem [#allocation3], %s192
          %s194 = smul.u32 16, %s30
          %s196 = ssub.s32 2048, 2048
          %197 = vsyncadd %s190, %s196
          %s198 = smul.addr %s194, 2
          %s199 = sadd.s32 %s31, %s198
          %s200 = smul.addr %s199, 128
          %s201 = scalar_lea.hbm %s0, %s200
          %s202 = sshll.u32 %s193, 4
          %s203 = int_to_ptr.vmem [resolvable:$true] %s202
          %208 = dma.hbm_to_vmem [thread:$0]  %s201, 2048, %s203, %s190, 256, 128, 8
        $region20: #{tpu_custom_call.1} parent=15 // pred_fallthru
          _
        // Predicated region
        $region21: #{tpu_custom_call.1} parent=15 // pred_check
          %p209 = pneg %p83
        $region22: #{tpu_custom_call.1} parent=15 // pred_check_branch
          %211 = sbr.rel (%p209) target = $region24
        $region23: #{tpu_custom_call.1} parent=15 // pred_region
          %s212 = sand.u32 %s73, 1
          %s213 = scalar_lea.sflag [#allocation7], %s212
          %s214 = sand.u32 %s73, 1
          %s215 = smul.addr %s214, 64
          %s216 = scalar_lea.vmem [#allocation6], %s215
          %s217 = smul.u32 16, %s31
          %s219 = ssub.s32 1024, 1024
          %220 = vsyncadd %s213, %s219
          %s221 = smul.addr %s217, 64
          %s222 = scalar_lea.hbm %s1, %s221
          %s223 = sshll.u32 %s216, 4
          %s224 = int_to_ptr.vmem [resolvable:$true] %s223
          %229 = dma.hbm_to_vmem [thread:$0]  %s222, 1024, %s224, %s213, 64, 64, 4
        $region24: #{tpu_custom_call.1} parent=15 // pred_fallthru
          _
      $region16: #{tpu_custom_call.1} parent=5 // pred_fallthru
        _
      %p230 = scmp.le.s32.totalorder 1, %s23
      %p231 = scmp.lt.s32.totalorder %s23, 5
      %p232 = pnand %p230, %p231
      %p233 = pneg %p232
      // Predicated region
      $region25: #{tpu_custom_call.1} parent=5 // pred_check
        _
      $region26: #{tpu_custom_call.1} parent=5 // pred_check_branch
        %235 = sbr.rel (%p232) target = $region28
      $region27: #{tpu_custom_call.1} parent=5 // pred_region
        %s236 = ssub.s32 %s23, 1
        %s237 = sand.u32 %s50, 1
        %s238 = scalar_lea.sflag [#allocation4], %s237
        %s239 = sand.u32 %s50, 1
        %s240 = smul.addr %s239, 128
        %s241 = scalar_lea.vmem [#allocation3], %s240
        // Predicated region
        $region29: #{tpu_custom_call.1} parent=27 // pred_check
          %p242 = pneg %p63
        $region30: #{tpu_custom_call.1} parent=27 // pred_check_branch
          %244 = sbr.rel (%p242) target = $region32
        $region31: #{tpu_custom_call.1} parent=27 // pred_region
          %245 = dma.done %s238, 2048
        $region32: #{tpu_custom_call.1} parent=27 // pred_fallthru
          _
        %s246 = sand.u32 %s76, 1
        %s247 = scalar_lea.sflag [#allocation7], %s246
        %s248 = sand.u32 %s76, 1
        %s249 = smul.addr %s248, 64
        %s250 = scalar_lea.vmem [#allocation6], %s249
        // Predicated region
        $region33: #{tpu_custom_call.1} parent=27 // pred_check
          %p251 = pneg %p89
        $region34: #{tpu_custom_call.1} parent=27 // pred_check_branch
          %253 = sbr.rel (%p251) target = $region36
        $region35: #{tpu_custom_call.1} parent=27 // pred_region
          %254 = dma.done %s247, 1024
        $region36: #{tpu_custom_call.1} parent=27 // pred_fallthru
          _
        %s255 = sand.u32 %s50, 1
        %s256 = scalar_lea.sflag [#allocation4], %s255
        %s257 = sand.u32 %s50, 1
        %s258 = smul.addr %s257, 128
        %s259 = scalar_lea.vmem [#allocation3], %s258
        %p260 = pneg %p63
        %p261 = pneg %p60
        %s262 = sand.u32 %s76, 1
        %s263 = scalar_lea.sflag [#allocation7], %s262
        %s264 = sand.u32 %s76, 1
        %s265 = smul.addr %s264, 64
        %s266 = scalar_lea.vmem [#allocation6], %s265
        %p267 = pneg %p89
        %p268 = pneg %p86
        %p269 = pneg %p115
        %p270 = pneg %p112
        %s271 = sand.u32 %s102, 1
        %s272 = scalar_lea.sflag [#allocation5], %s271
        %s273 = sand.u32 %s102, 1
        %s274 = smul.addr %s273, 64
        %s275 = scalar_lea.vmem [#allocation8], %s274
        %p276 = pneg %p141
        %p277 = pneg %p138
        %s278 = sand.u32 %s28, 1
        %s279 = scalar_lea.sflag [#allocation10], %s278
        %s280 = sand.u32 %s128, 1
        %s281 = scalar_lea.vmem [#allocation9], %s280
        %p282 = pneg %p167
        %p283 = pneg %p164
        %s284 = sand.u32 %s28, 1
        %s285 = scalar_lea.sflag [#allocation10], %s284
        %s286 = sand.u32 %s154, 1
        %s287 = scalar_lea.vmem [#allocation11], %s286
        %s288 = smul.u32 16, %s32
        %s289 = smul.u32 16, %s33
        %s290 = smul.u32 16, %s32
        %p292 = scmp.eq.s32.totalorder %s33, 0
        // Predicated region
        $region37: #{tpu_custom_call.1} parent=27 // pred_check
          %p293 = pneg %p292
        $region38: #{tpu_custom_call.1} parent=27 // pred_check_branch
          %295 = sbr.rel (%p293) target = $region40
        $region39: #{tpu_custom_call.1} parent=27 // pred_region
          %296 = vst [vmem:[#allocation2] sm:$0xff] 0.0
          %297 = vst [vmem:[#allocation2 + $0x8] sm:$0xff] 0.0
          %298 = vst [vmem:[#allocation2 + $0x10] sm:$0xff] 0.0
          %299 = vst [vmem:[#allocation2 + $0x18] sm:$0xff] 0.0
          %300 = vst [vmem:[#allocation2 + $0x20] sm:$0xff] 0.0
          %301 = vst [vmem:[#allocation2 + $0x28] sm:$0xff] 0.0
          %302 = vst [vmem:[#allocation2 + $0x30] sm:$0xff] 0.0
          %303 = vst [vmem:[#allocation2 + $0x38] sm:$0xff] 0.0
          %304 = vst [vmem:[#allocation2 + $0x40] sm:$0xff] 0.0
          %305 = vst [vmem:[#allocation2 + $0x48] sm:$0xff] 0.0
          %306 = vst [vmem:[#allocation2 + $0x50] sm:$0xff] 0.0
          %307 = vst [vmem:[#allocation2 + $0x58] sm:$0xff] 0.0
          %308 = vst [vmem:[#allocation2 + $0x60] sm:$0xff] 0.0
          %309 = vst [vmem:[#allocation2 + $0x68] sm:$0xff] 0.0
          %310 = vst [vmem:[#allocation2 + $0x70] sm:$0xff] 0.0
          %311 = vst [vmem:[#allocation2 + $0x78] sm:$0xff] 0.0
        $region40: #{tpu_custom_call.1} parent=27 // pred_fallthru
          _
        %v312 = vld [vmem:[#allocation2] sm:$0xff]
        %v313 = vld [vmem:[#allocation2 + $0x8] sm:$0xff]
        %v314 = vld [vmem:[#allocation2 + $0x10] sm:$0xff]
        %v315 = vld [vmem:[#allocation2 + $0x18] sm:$0xff]
        %v316 = vld [vmem:[#allocation2 + $0x20] sm:$0xff]
        %v317 = vld [vmem:[#allocation2 + $0x28] sm:$0xff]
        %v318 = vld [vmem:[#allocation2 + $0x30] sm:$0xff]
        %v319 = vld [vmem:[#allocation2 + $0x38] sm:$0xff]
        %v320 = vld [vmem:[#allocation2 + $0x40] sm:$0xff]
        %v321 = vld [vmem:[#allocation2 + $0x48] sm:$0xff]
        %v322 = vld [vmem:[#allocation2 + $0x50] sm:$0xff]
        %v323 = vld [vmem:[#allocation2 + $0x58] sm:$0xff]
        %v324 = vld [vmem:[#allocation2 + $0x60] sm:$0xff]
        %v325 = vld [vmem:[#allocation2 + $0x68] sm:$0xff]
        %v326 = vld [vmem:[#allocation2 + $0x70] sm:$0xff]
        %v327 = vld [vmem:[#allocation2 + $0x78] sm:$0xff]
        %v328 = vld [vmem:[%s241] sm:$0xff]
        %v329 = vld [vmem:[%s241 + $0x8] sm:$0xff]
        %v330 = vld [vmem:[%s241 + $0x10] sm:$0xff]
        %v331 = vld [vmem:[%s241 + $0x18] sm:$0xff]
        %v332 = vld [vmem:[%s241 + $0x20] sm:$0xff]
        %v333 = vld [vmem:[%s241 + $0x28] sm:$0xff]
        %v334 = vld [vmem:[%s241 + $0x30] sm:$0xff]
        %v335 = vld [vmem:[%s241 + $0x38] sm:$0xff]
        %v336 = vld [vmem:[%s241 + $0x40] sm:$0xff]
        %v337 = vld [vmem:[%s241 + $0x48] sm:$0xff]
        %v338 = vld [vmem:[%s241 + $0x50] sm:$0xff]
        %v339 = vld [vmem:[%s241 + $0x58] sm:$0xff]
        %v340 = vld [vmem:[%s241 + $0x60] sm:$0xff]
        %v341 = vld [vmem:[%s241 + $0x68] sm:$0xff]
        %v342 = vld [vmem:[%s241 + $0x70] sm:$0xff]
        %v343 = vld [vmem:[%s241 + $0x78] sm:$0xff]
        %v344 = vpack.c.bf16 %v329, %v328
        %v345 = vpack.c.bf16 %v331, %v330
        %v346 = vpack.c.bf16 %v333, %v332
        %v347 = vpack.c.bf16 %v335, %v334
        %v348 = vpack.c.bf16 %v337, %v336
        %v349 = vpack.c.bf16 %v339, %v338
        %v350 = vpack.c.bf16 %v341, %v340
        %v351 = vpack.c.bf16 %v343, %v342
        %v352 = vld [vmem:[%s250] sm:$0xf]
        %v353 = vld [vmem:[%s250 + $0x4] sm:$0xf]
        %v354 = vld [vmem:[%s250 + $0x8] sm:$0xf]
        %v355 = vld [vmem:[%s250 + $0xc] sm:$0xf]
        %v356 = vld [vmem:[%s250 + $0x10] sm:$0xf]
        %v357 = vld [vmem:[%s250 + $0x14] sm:$0xf]
        %v358 = vld [vmem:[%s250 + $0x18] sm:$0xf]
        %v359 = vld [vmem:[%s250 + $0x1c] sm:$0xf]
        %v360 = vld [vmem:[%s250 + $0x20] sm:$0xf]
        %v361 = vld [vmem:[%s250 + $0x24] sm:$0xf]
        %v362 = vld [vmem:[%s250 + $0x28] sm:$0xf]
        %v363 = vld [vmem:[%s250 + $0x2c] sm:$0xf]
        %v364 = vld [vmem:[%s250 + $0x30] sm:$0xf]
        %v365 = vld [vmem:[%s250 + $0x34] sm:$0xf]
        %v366 = vld [vmem:[%s250 + $0x38] sm:$0xf]
        %v367 = vld [vmem:[%s250 + $0x3c] sm:$0xf]
        %v384 = vunpack.c.l.b16 %v352
        %v385 = vunpack.c.l.b16 %v353
        %v386 = vunpack.c.l.b16 %v354
        %v387 = vunpack.c.l.b16 %v355
        %v388 = vunpack.c.l.b16 %v356
        %v389 = vunpack.c.l.b16 %v357
        %v390 = vunpack.c.l.b16 %v358
        %v391 = vunpack.c.l.b16 %v359
        %v392 = vunpack.c.l.b16 %v360
        %v393 = vunpack.c.l.b16 %v361
        %v394 = vunpack.c.l.b16 %v362
        %v395 = vunpack.c.l.b16 %v363
        %v396 = vunpack.c.l.b16 %v364
        %v397 = vunpack.c.l.b16 %v365
        %v398 = vunpack.c.l.b16 %v366
        %v399 = vunpack.c.l.b16 %v367
        %v400 = vpack.c.b16 %v385, %v384
        %v401 = vpack.c.b16 %v387, %v386
        %v402 = vpack.c.b16 %v389, %v388
        %v403 = vpack.c.b16 %v391, %v390
        %v404 = vpack.c.b16 %v393, %v392
        %v405 = vpack.c.b16 %v395, %v394
        %v406 = vpack.c.b16 %v397, %v396
        %v407 = vpack.c.b16 %v399, %v398
        %416 = vmatprep.subr.bf16.mxu0 0
        %417 = vmatpush1.bf16.msra.mxu0 %v407
        %418 = vmatprep.subr.bf16.mxu0 0
        %419 = vmatpush1.bf16.msra.mxu0 %v406
        %420 = vmatprep.subr.bf16.mxu0 0
        %421 = vmatpush1.bf16.msra.mxu0 %v405
        %422 = vmatprep.subr.bf16.mxu0 0
        %423 = vmatpush1.bf16.msra.mxu0 %v404
        %424 = vmatprep.subr.bf16.mxu0 0
        %425 = vmatpush1.bf16.msra.mxu0 %v403
        %426 = vmatprep.subr.bf16.mxu0 0
        %427 = vmatpush1.bf16.msra.mxu0 %v402
        %428 = vmatprep.subr.bf16.mxu0 0
        %429 = vmatpush1.bf16.msra.mxu0 %v401
        %430 = vmatprep.subr.bf16.mxu0 0
        %431 = vmatpush1.bf16.msra.mxu0 %v400
        %432 = vmatprep.subr.bf16.mxu0 0
        %433 = vmatpush2.bf16.msra.mxu0 0
        %434 = vmatprep.subr.bf16.mxu0 0
        %435 = vmatpush2.bf16.msra.mxu0 0
        %436 = vmatprep.subr.bf16.mxu0 0
        %437 = vmatpush2.bf16.msra.mxu0 0
        %438 = vmatprep.subr.bf16.mxu0 0
        %439 = vmatpush2.bf16.msra.mxu0 0
        %440 = vmatprep.subr.bf16.mxu0 0
        %441 = vmatpush2.bf16.msra.mxu0 0
        %442 = vmatprep.subr.bf16.mxu0 0
        %443 = vmatpush2.bf16.msra.mxu0 0
        %444 = vmatprep.subr.bf16.mxu0 0
        %445 = vmatpush2.bf16.msra.mxu0 0
        %446 = vmatprep.subr.bf16.mxu0 0
        %447 = vmatpush2.bf16.msra.mxu0 0
        %448 = vmatprep.mubr.bf16.mxu0 0
        %449 = vmatmul.mubr.bf16.gmra.mxu0 %v344
        %v450 = vpop.f32.mrf.mxu0
        %v451 = vadd.f32 0.0, %v450
        %v452 = vpop.f32.mrf.mxu0
        %v453 = vpop.f32.mrf.mxu0
        %v454 = vadd.f32 0.0, %v453
        %v455 = vpop.f32.mrf.mxu0
        %456 = vmatprep.mubr.bf16.mxu0 0
        %457 = vmatmul.mubr.bf16.gmra.mxu0 %v345
        %v458 = vpop.f32.mrf.mxu0
        %v459 = vadd.f32 0.0, %v458
        %v460 = vpop.f32.mrf.mxu0
        %v461 = vpop.f32.mrf.mxu0
        %v462 = vadd.f32 0.0, %v461
        %v463 = vpop.f32.mrf.mxu0
        %464 = vmatprep.mubr.bf16.mxu0 0
        %465 = vmatmul.mubr.bf16.gmra.mxu0 %v346
        %v466 = vpop.f32.mrf.mxu0
        %v467 = vadd.f32 0.0, %v466
        %v468 = vpop.f32.mrf.mxu0
        %v469 = vpop.f32.mrf.mxu0
        %v470 = vadd.f32 0.0, %v469
        %v471 = vpop.f32.mrf.mxu0
        %472 = vmatprep.mubr.bf16.mxu0 0
        %473 = vmatmul.mubr.bf16.gmra.mxu0 %v347
        %v474 = vpop.f32.mrf.mxu0
        %v475 = vadd.f32 0.0, %v474
        %v476 = vpop.f32.mrf.mxu0
        %v477 = vpop.f32.mrf.mxu0
        %v478 = vadd.f32 0.0, %v477
        %v479 = vpop.f32.mrf.mxu0
        %480 = vmatprep.mubr.bf16.mxu0 0
        %481 = vmatmul.mubr.bf16.gmra.mxu0 %v348
        %v482 = vpop.f32.mrf.mxu0
        %v483 = vadd.f32 0.0, %v482
        %v484 = vpop.f32.mrf.mxu0
        %v485 = vpop.f32.mrf.mxu0
        %v486 = vadd.f32 0.0, %v485
        %v487 = vpop.f32.mrf.mxu0
        %488 = vmatprep.mubr.bf16.mxu0 0
        %489 = vmatmul.mubr.bf16.gmra.mxu0 %v349
        %v490 = vpop.f32.mrf.mxu0
        %v491 = vadd.f32 0.0, %v490
        %v492 = vpop.f32.mrf.mxu0
        %v493 = vpop.f32.mrf.mxu0
        %v494 = vadd.f32 0.0, %v493
        %v495 = vpop.f32.mrf.mxu0
        %496 = vmatprep.mubr.bf16.mxu0 0
        %497 = vmatmul.mubr.bf16.gmra.mxu0 %v350
        %v498 = vpop.f32.mrf.mxu0
        %v499 = vadd.f32 0.0, %v498
        %v500 = vpop.f32.mrf.mxu0
        %v501 = vpop.f32.mrf.mxu0
        %v502 = vadd.f32 0.0, %v501
        %v503 = vpop.f32.mrf.mxu0
        %504 = vmatprep.mubr.bf16.mxu0 0
        %505 = vmatmul.mubr.bf16.gmra.mxu0 %v351
        %v506 = vpop.f32.mrf.mxu0
        %v507 = vadd.f32 0.0, %v506
        %v508 = vpop.f32.mrf.mxu0
        %v509 = vpop.f32.mrf.mxu0
        %v510 = vadd.f32 0.0, %v509
        %v511 = vpop.f32.mrf.mxu0
        %512 = vdwg.mxu0
        %v513 = vadd.f32 %v312, %v451
        %v514 = vadd.f32 %v313, %v454
        %v515 = vadd.f32 %v314, %v459
        %v516 = vadd.f32 %v315, %v462
        %v517 = vadd.f32 %v316, %v467
        %v518 = vadd.f32 %v317, %v470
        %v519 = vadd.f32 %v318, %v475
        %v520 = vadd.f32 %v319, %v478
        %v521 = vadd.f32 %v320, %v483
        %v522 = vadd.f32 %v321, %v486
        %v523 = vadd.f32 %v322, %v491
        %v524 = vadd.f32 %v323, %v494
        %v525 = vadd.f32 %v324, %v499
        %v526 = vadd.f32 %v325, %v502
        %v527 = vadd.f32 %v326, %v507
        %v528 = vadd.f32 %v327, %v510
        %529 = vst [vmem:[#allocation2] sm:$0xff] %v513
        %530 = vst [vmem:[#allocation2 + $0x8] sm:$0xff] %v514
        %531 = vst [vmem:[#allocation2 + $0x10] sm:$0xff] %v515
        %532 = vst [vmem:[#allocation2 + $0x18] sm:$0xff] %v516
        %533 = vst [vmem:[#allocation2 + $0x20] sm:$0xff] %v517
        %534 = vst [vmem:[#allocation2 + $0x28] sm:$0xff] %v518
        %535 = vst [vmem:[#allocation2 + $0x30] sm:$0xff] %v519
        %536 = vst [vmem:[#allocation2 + $0x38] sm:$0xff] %v520
        %537 = vst [vmem:[#allocation2 + $0x40] sm:$0xff] %v521
        %538 = vst [vmem:[#allocation2 + $0x48] sm:$0xff] %v522
        %539 = vst [vmem:[#allocation2 + $0x50] sm:$0xff] %v523
        %540 = vst [vmem:[#allocation2 + $0x58] sm:$0xff] %v524
        %541 = vst [vmem:[#allocation2 + $0x60] sm:$0xff] %v525
        %542 = vst [vmem:[#allocation2 + $0x68] sm:$0xff] %v526
        %543 = vst [vmem:[#allocation2 + $0x70] sm:$0xff] %v527
        %544 = vst [vmem:[#allocation2 + $0x78] sm:$0xff] %v528
        %p545 = scmp.eq.s32.totalorder %s33, 1
        // Predicated region
        $region41: #{tpu_custom_call.1} parent=27 // pred_check
          %p546 = pneg %p545
        $region42: #{tpu_custom_call.1} parent=27 // pred_check_branch
          %548 = sbr.rel (%p546) target = $region44
        $region43: #{tpu_custom_call.1} parent=27 // pred_region
          %v549 = vld [vmem:[#allocation2] sm:$0xff]
          %v550 = vld [vmem:[#allocation2 + $0x8] sm:$0xff]
          %v551 = vld [vmem:[#allocation2 + $0x10] sm:$0xff]
          %v552 = vld [vmem:[#allocation2 + $0x18] sm:$0xff]
          %v553 = vld [vmem:[#allocation2 + $0x20] sm:$0xff]
          %v554 = vld [vmem:[#allocation2 + $0x28] sm:$0xff]
          %v555 = vld [vmem:[#allocation2 + $0x30] sm:$0xff]
          %v556 = vld [vmem:[#allocation2 + $0x38] sm:$0xff]
          %v557 = vld [vmem:[#allocation2 + $0x40] sm:$0xff]
          %v558 = vld [vmem:[#allocation2 + $0x48] sm:$0xff]
          %v559 = vld [vmem:[#allocation2 + $0x50] sm:$0xff]
          %v560 = vld [vmem:[#allocation2 + $0x58] sm:$0xff]
          %v561 = vld [vmem:[#allocation2 + $0x60] sm:$0xff]
          %v562 = vld [vmem:[#allocation2 + $0x68] sm:$0xff]
          %v563 = vld [vmem:[#allocation2 + $0x70] sm:$0xff]
          %v564 = vld [vmem:[#allocation2 + $0x78] sm:$0xff]
          %v565 = vpack.c.bf16 %v550, %v549
          %v566 = vpack.c.bf16 %v552, %v551
          %v567 = vpack.c.bf16 %v554, %v553
          %v568 = vpack.c.bf16 %v556, %v555
          %v569 = vpack.c.bf16 %v558, %v557
          %v570 = vpack.c.bf16 %v560, %v559
          %v571 = vpack.c.bf16 %v562, %v561
          %v572 = vpack.c.bf16 %v564, %v563
          %v581 = vunpack.c.l.b16 %v565
          %v582 = vunpack.c.h.b16 %v565
          %v583 = vunpack.c.l.b16 %v566
          %v584 = vunpack.c.h.b16 %v566
          %v585 = vunpack.c.l.b16 %v567
          %v586 = vunpack.c.h.b16 %v567
          %v587 = vunpack.c.l.b16 %v568
          %v588 = vunpack.c.h.b16 %v568
          %v589 = vunpack.c.l.b16 %v569
          %v590 = vunpack.c.h.b16 %v569
          %v591 = vunpack.c.l.b16 %v570
          %v592 = vunpack.c.h.b16 %v570
          %v593 = vunpack.c.l.b16 %v571
          %v594 = vunpack.c.h.b16 %v571
          %v595 = vunpack.c.l.b16 %v572
          %v596 = vunpack.c.h.b16 %v572
          %v597 = vpack.c.b16 %v581, %v581
          %v598 = vpack.c.b16 %v582, %v582
          %v599 = vpack.c.b16 %v583, %v583
          %v600 = vpack.c.b16 %v584, %v584
          %v601 = vpack.c.b16 %v585, %v585
          %v602 = vpack.c.b16 %v586, %v586
          %v603 = vpack.c.b16 %v587, %v587
          %v604 = vpack.c.b16 %v588, %v588
          %v605 = vpack.c.b16 %v589, %v589
          %v606 = vpack.c.b16 %v590, %v590
          %v607 = vpack.c.b16 %v591, %v591
          %v608 = vpack.c.b16 %v592, %v592
          %v609 = vpack.c.b16 %v593, %v593
          %v610 = vpack.c.b16 %v594, %v594
          %v611 = vpack.c.b16 %v595, %v595
          %v612 = vpack.c.b16 %v596, %v596
          %629 = vst [vmem:[%s275] sm:$0xf] %v597
          %630 = vst [vmem:[%s275 + $0x4] sm:$0xf] %v598
          %631 = vst [vmem:[%s275 + $0x8] sm:$0xf] %v599
          %632 = vst [vmem:[%s275 + $0xc] sm:$0xf] %v600
          %633 = vst [vmem:[%s275 + $0x10] sm:$0xf] %v601
          %634 = vst [vmem:[%s275 + $0x14] sm:$0xf] %v602
          %635 = vst [vmem:[%s275 + $0x18] sm:$0xf] %v603
          %636 = vst [vmem:[%s275 + $0x1c] sm:$0xf] %v604
          %637 = vst [vmem:[%s275 + $0x20] sm:$0xf] %v605
          %638 = vst [vmem:[%s275 + $0x24] sm:$0xf] %v606
          %639 = vst [vmem:[%s275 + $0x28] sm:$0xf] %v607
          %640 = vst [vmem:[%s275 + $0x2c] sm:$0xf] %v608
          %641 = vst [vmem:[%s275 + $0x30] sm:$0xf] %v609
          %642 = vst [vmem:[%s275 + $0x34] sm:$0xf] %v610
          %643 = vst [vmem:[%s275 + $0x38] sm:$0xf] %v611
          %644 = vst [vmem:[%s275 + $0x3c] sm:$0xf] %v612
          %v645 = vadd.f32 %v549, %v550
          %v646 = vadd.f32 %v645, %v551
          %v647 = vadd.f32 %v646, %v552
          %v648 = vadd.f32 %v647, %v553
          %v649 = vadd.f32 %v648, %v554
          %v650 = vadd.f32 %v649, %v555
          %v651 = vadd.f32 %v650, %v556
          %v652 = vadd.f32 %v651, %v557
          %v653 = vadd.f32 %v652, %v558
          %v654 = vadd.f32 %v653, %v559
          %v655 = vadd.f32 %v654, %v560
          %v656 = vadd.f32 %v655, %v561
          %v657 = vadd.f32 %v656, %v562
          %v658 = vadd.f32 %v657, %v563
          %v659 = vadd.f32 %v658, %v564
          %v660 = vrot.slane %v659, 4
          %v661 = vadd.f32 %v659, %v660
          %v662 = vrot.slane %v661, 2
          %v663 = vadd.f32 %v661, %v662
          %v664 = vrot.slane %v663, 1
          %v665 = vadd.f32 %v663, %v664
          %666 = vst [vmem:[%s281] sm:$0x1] %v665
          %v667 = vmul.f32 %v549, %v549
          %v668 = vmul.f32 %v550, %v550
          %v669 = vmul.f32 %v551, %v551
          %v670 = vmul.f32 %v552, %v552
          %v671 = vmul.f32 %v553, %v553
          %v672 = vmul.f32 %v554, %v554
          %v673 = vmul.f32 %v555, %v555
          %v674 = vmul.f32 %v556, %v556
          %v675 = vmul.f32 %v557, %v557
          %v676 = vmul.f32 %v558, %v558
          %v677 = vmul.f32 %v559, %v559
          %v678 = vmul.f32 %v560, %v560
          %v679 = vmul.f32 %v561, %v561
          %v680 = vmul.f32 %v562, %v562
          %v681 = vmul.f32 %v563, %v563
          %v682 = vmul.f32 %v564, %v564
          %v683 = vadd.f32 %v667, %v668
          %v684 = vadd.f32 %v683, %v669
          %v685 = vadd.f32 %v684, %v670
          %v686 = vadd.f32 %v685, %v671
          %v687 = vadd.f32 %v686, %v672
          %v688 = vadd.f32 %v687, %v673
          %v689 = vadd.f32 %v688, %v674
          %v690 = vadd.f32 %v689, %v675
          %v691 = vadd.f32 %v690, %v676
          %v692 = vadd.f32 %v691, %v677
          %v693 = vadd.f32 %v692, %v678
          %v694 = vadd.f32 %v693, %v679
          %v695 = vadd.f32 %v694, %v680
          %v696 = vadd.f32 %v695, %v681
          %v697 = vadd.f32 %v696, %v682
          %v698 = vrot.slane %v697, 4
          %v699 = vadd.f32 %v697, %v698
          %v700 = vrot.slane %v699, 2
          %v701 = vadd.f32 %v699, %v700
          %v702 = vrot.slane %v701, 1
          %v703 = vadd.f32 %v701, %v702
          %704 = vst [vmem:[%s287] sm:$0x1] %v703
        $region44: #{tpu_custom_call.1} parent=27 // pred_fallthru
          _
        %s705 = sand.u32 %s102, 1
        %s706 = scalar_lea.sflag [#allocation5], %s705
        %s707 = sand.u32 %s102, 1
        %s708 = smul.addr %s707, 64
        %s709 = scalar_lea.vmem [#allocation8], %s708
        %s710 = sand.u32 %s28, 1
        %s711 = scalar_lea.sflag [#allocation10], %s710
        %s712 = sand.u32 %s128, 1
        %s713 = scalar_lea.vmem [#allocation9], %s712
        %s714 = sand.u32 %s28, 1
        %s715 = scalar_lea.sflag [#allocation10], %s714
        %s716 = sand.u32 %s154, 1
        %s717 = scalar_lea.vmem [#allocation11], %s716
        // Predicated region
        $region45: #{tpu_custom_call.1} parent=27 // pred_check
          %p718 = pneg %p112
        $region46: #{tpu_custom_call.1} parent=27 // pred_check_branch
          %720 = sbr.rel (%p718) target = $region48
        $region47: #{tpu_custom_call.1} parent=27 // pred_region
          %s721 = smul.u32 16, %s32
          %s723 = ssub.s32 1024, 1024
          %724 = vsyncadd %s706, %s723
          %s725 = smul.addr %s721, 64
          %s726 = scalar_lea.hbm %s2, %s725
          %s727 = sshll.u32 %s709, 4
          %s728 = int_to_ptr.vmem [resolvable:$true] %s727
          %733 = dma.vmem_to_hbm [thread:$0]  %s728, 1024, %s726, %s706, 64, 64, 4
        $region48: #{tpu_custom_call.1} parent=27 // pred_fallthru
          _
        // Predicated region
        $region49: #{tpu_custom_call.1} parent=27 // pred_check
          %p734 = pneg %p138
        $region50: #{tpu_custom_call.1} parent=27 // pred_check_branch
          %736 = sbr.rel (%p734) target = $region52
        $region51: #{tpu_custom_call.1} parent=27 // pred_region
          %s738 = ssub.s32 16, 16
          %739 = vsyncadd %s711, %s738
          %s740 = smul.addr %s32, 16
          %s741 = scalar_lea.hbm %s3, %s740
          %s743 = sshll.u32 %s713, 4
          %s744 = int_to_ptr.vmem [resolvable:$true] %s743
          %746 = dma.vmem_to_hbm [thread:$0]  %s744, 16, %s741, %s711
        $region52: #{tpu_custom_call.1} parent=27 // pred_fallthru
          _
        // Predicated region
        $region53: #{tpu_custom_call.1} parent=27 // pred_check
          %p747 = pneg %p164
        $region54: #{tpu_custom_call.1} parent=27 // pred_check_branch
          %749 = sbr.rel (%p747) target = $region56
        $region55: #{tpu_custom_call.1} parent=27 // pred_region
          %s751 = ssub.s32 16, 16
          %752 = vsyncadd %s715, %s751
          %s753 = smul.addr %s32, 16
          %s754 = scalar_lea.hbm %s4, %s753
          %s756 = sshll.u32 %s717, 4
          %s757 = int_to_ptr.vmem [resolvable:$true] %s756
          %759 = dma.vmem_to_hbm [thread:$0]  %s757, 16, %s754, %s715
        $region56: #{tpu_custom_call.1} parent=27 // pred_fallthru
          _
      $region28: #{tpu_custom_call.1} parent=5 // pred_fallthru
        _
      %p760 = scmp.le.s32.totalorder 2, %s23
      // Predicated region
      $region57: #{tpu_custom_call.1} parent=5 // pred_check
        %p761 = pneg %p760
      $region58: #{tpu_custom_call.1} parent=5 // pred_check_branch
        %763 = sbr.rel (%p761) target = $region60
      $region59: #{tpu_custom_call.1} parent=5 // pred_region
        %s764 = ssub.s32 %s23, 2
        // Predicated region
        $region61: #{tpu_custom_call.1} parent=59 // pred_check
          %p765 = pneg %p118
        $region62: #{tpu_custom_call.1} parent=59 // pred_check_branch
          %767 = sbr.rel (%p765) target = $region64
        $region63: #{tpu_custom_call.1} parent=59 // pred_region
          %s768 = sand.u32 %s103, 1
          %s769 = scalar_lea.sflag [#allocation5], %s768
          %s770 = sand.u32 %s103, 1
          %s771 = smul.addr %s770, 64
          %s772 = scalar_lea.vmem [#allocation8], %s771
          %773 = dma.done %s769, 1024
        $region64: #{tpu_custom_call.1} parent=59 // pred_fallthru
          _
        // Predicated region
        $region65: #{tpu_custom_call.1} parent=59 // pred_check
          %p774 = pneg %p144
        $region66: #{tpu_custom_call.1} parent=59 // pred_check_branch
          %776 = sbr.rel (%p774) target = $region68
        $region67: #{tpu_custom_call.1} parent=59 // pred_region
          %s777 = sand.u32 %s29, 1
          %s778 = scalar_lea.sflag [#allocation10], %s777
          %s779 = sand.u32 %s129, 1
          %s780 = scalar_lea.vmem [#allocation9], %s779
          %781 = dma.done %s778, 16
        $region68: #{tpu_custom_call.1} parent=59 // pred_fallthru
          _
        // Predicated region
        $region69: #{tpu_custom_call.1} parent=59 // pred_check
          %p782 = pneg %p170
        $region70: #{tpu_custom_call.1} parent=59 // pred_check_branch
          %784 = sbr.rel (%p782) target = $region72
        $region71: #{tpu_custom_call.1} parent=59 // pred_region
          %s785 = sand.u32 %s29, 1
          %s786 = scalar_lea.sflag [#allocation10], %s785
          %s787 = sand.u32 %s155, 1
          %s788 = scalar_lea.vmem [#allocation11], %s787
          %789 = dma.done %s786, 16
        $region72: #{tpu_custom_call.1} parent=59 // pred_fallthru
          _
      $region60: #{tpu_custom_call.1} parent=5 // pred_fallthru
        _
    $region6: #{tpu_custom_call.1} parent=1 // loop_footer
      %s27 = sadd.s32 1, %s23
    $region7: #{tpu_custom_call.1} parent=1 // loop_footer_branch
      %22 = sbr.rel target = $region3
    $region8: #{tpu_custom_call.1} parent=1 // loop_exit
      _
    %790 = vsyncpa [#allocation4], 1
    %s791 = scalar_lea.sflag [#allocation4], 1
    %792 = vsyncpa %s791, 1
    %793 = vsyncpa [#allocation7], 1
    %s794 = scalar_lea.sflag [#allocation7], 1
    %795 = vsyncpa %s794, 1
    %796 = vsyncpa [#allocation5], 1
    %s797 = scalar_lea.sflag [#allocation5], 1
    %798 = vsyncpa %s797, 1
    %799 = vsyncpa [#allocation10], 1
    %s800 = scalar_lea.sflag [#allocation10], 1
    %801 = vsyncpa %s800, 1

</llo_original>
